<compile_context>
chip_gen: v5e
topology: v5e:2x2
jax: 0.10.0
libtpu: 0.0.40
codegen_flags: <defaults>
</compile_context>

<pallas_src>
import math
from functools import partial

import numpy as np
import jax
import jax.numpy as jnp
from jax import lax
from jax.experimental import pallas as pl
from jax.experimental.pallas import tpu as pltpu

LANE = 128


def _round_up(x, m):
    return (x + m - 1) // m * m


# ---------------------------------------------------------------------------
# Pallas kernel: one grid step == one GT channel's full forward chain
# ---------------------------------------------------------------------------
def gtn_channel_kernel(sw_ref, A_ref, X_ref, Wg_ref, out_ref, *,
                       num_channels, num_layers):
    """GTN forward for one channel (grid axis 0 = channel, 'parallel').

    sw_ref : SMEM f32[(num_layers+1) * C * E] -- softmaxed GTConv weights, flattened
             with index ((weight_idx * C + c) * E + e).
    A_ref  : VMEM f32[E, Np, Np]   zero-padded adjacency stack (last channel = identity).
    X_ref  : VMEM f32[Np, w_in]    zero-padded node features.
    Wg_ref : VMEM f32[w_in, wp]    zero-padded GTN.weight.
    out_ref: VMEM f32[Np, wp]      this channel's output block (relu(gcn_conv)).
    """
    c = pl.program_id(0)
    E, Np, _ = A_ref.shape
    C = num_channels

    def sw(widx, e):
        # Scalar SMEM read of the softmaxed GTConv weight for (weight-set, channel, edge).
        return sw_ref[(widx * C + c) * E + e]

    # Each adjacency channel is loaded from VMEM once per grid step and reused below.
    A = [A_ref[e] for e in range(E)]

    ii = lax.broadcasted_iota(jnp.int32, (Np, Np), 0)
    jj = lax.broadcasted_iota(jnp.int32, (Np, Np), 1)
    eye = (ii == jj).astype(jnp.float32)
    not_eye = 1.0 - eye

    def mxu(x):
        # MXU operands in bf16, accumulation stays f32 via preferred_element_type.
        return x.astype(jnp.bfloat16)

    def gtconv(widx):
        # GTConv: convex combination of adjacency channels.  Kept in f32 on the VPU
        # (v5e has no bf16 VALU); cast to bf16 only at the MXU boundary.
        acc = sw(widx, 0) * A[0]
        for e in range(1, E):
            acc = acc + sw(widx, e) * A[e]
        return acc

    def col_norm(H, add):
        # == GTN.norm(H, add): mask the diagonal (optionally add I) and divide every
        # column by its degree (column sum).  Divide goes to the EUP via approx recip.
        Hm = H * not_eye
        if add:
            Hm = Hm + eye
        deg = jnp.sum(Hm, axis=0, keepdims=True)            # (1, Np) column sums
        dinv = jnp.where(deg == 0.0, 0.0,
                         pl.reciprocal(deg + 1e-8, approx=True))
        return Hm * dinv

    # ---- GTLayer 0 (first=True): H = conv1(A)[c] @ conv2(A)[c] ----
    a0 = gtconv(0)
    b0 = gtconv(1)
    H = jnp.dot(mxu(a0), mxu(b0), preferred_element_type=jnp.float32)

    # ---- GTLayer i>0: H = norm(H, add=False) @ conv(A)[c] ----
    widx = 2
    for _ in range(1, num_layers):
        a = gtconv(widx)
        widx += 1
        H = jnp.dot(mxu(col_norm(H, add=False)), mxu(a),
                    preferred_element_type=jnp.float32)

    # ---- gcn_conv + ReLU:  norm(H, add=True)^T @ (X @ W) ----
    # X @ W is tiny; recompute per channel step (a cross-step scratch would break the
    # 'parallel' channel-axis sharding across v7x's two TensorCores).
    XW = jnp.dot(mxu(X_ref[...]), mxu(Wg_ref[...]),
                 preferred_element_type=jnp.float32)
    Hn = col_norm(H, add=True)
    # Contract dim 0 of the column-normalized H (== Hn^T @ XW): the transpose is folded
    # into the MXU feed instead of an explicit [Np,Np] XLU transpose + temporary.
    y = lax.dot_general(mxu(Hn), mxu(XW),
                        dimension_numbers=(((0,), (0,)), ((), ())),
                        preferred_element_type=jnp.float32)
    out_ref[...] = jnp.maximum(y, 0.0)   # single full-width (lane-dense) store


# ---------------------------------------------------------------------------
# Wrapper (padding + pallas_call plumbing)
# ---------------------------------------------------------------------------
def gtn_forward(A, X, conv_weights, gcn_weight):
    """Full GTN forward (inference branch, target=None).

    conv_weights: list per layer; layer 0 -> [w1, w2], others -> [w], each [C, E]
    gcn_weight:   [w_in, w_out]
    Returns (X_, Ws) with X_ : [N, C * w_out], Ws : softmaxed GTConv weights per layer.
    """
    E, N, _ = A.shape
    C = conv_weights[0][0].shape[0]
    L = len(conv_weights)
    w_in = X.shape[1]
    w_out = gcn_weight.shape[1]

    # Lane-dense padding: node count and per-channel output width -> multiples of 128.
    Np = _round_up(N, LANE)
    wp = _round_up(w_out, LANE)

    A_p = jnp.zeros((E, Np, Np), jnp.float32).at[:, :N, :N].set(A.astype(jnp.float32))
    X_p = jnp.zeros((Np, w_in), jnp.float32).at[:N, :].set(X.astype(jnp.float32))
    Wg_p = jnp.zeros((w_in, wp), jnp.float32).at[:, :w_out].set(gcn_weight.astype(jnp.float32))

    # One stacked softmax for every layer's GTConv weights; flattened 1-D for cheap SMEM.
    flat_ws = [w for layer_ws in conv_weights for w in layer_ws]     # L+1 arrays of [C, E]
    stacked = jnp.stack(flat_ws, axis=0)                             # [L+1, C, E]
    sw = jax.nn.softmax(stacked, axis=-1)
    sw_flat = sw.reshape(-1).astype(jnp.float32)

    # Explicit VMEM budget: generous for the toy size, clamped under v7x's 64 MiB VMEM.
    raw_bytes = 4 * (E * Np * Np + Np * w_in + w_in * wp + 2 * Np * wp + 10 * Np * Np)
    vmem_limit = int(min(60 * 2**20, max(32 * 2**20, 2 * raw_bytes)))

    out_p = pl.pallas_call(
        partial(gtn_channel_kernel, num_channels=C, num_layers=L),
        out_shape=jax.ShapeDtypeStruct((Np, C * wp), jnp.float32),
        grid=(C,),
        in_specs=[
            # Softmaxed GTConv weights: tiny scalar table in SMEM.
            pl.BlockSpec(memory_space=pltpu.MemorySpace.SMEM),
            # A / X / W are shared (same block index every step -> DMA'd once, reused).
            pl.BlockSpec((E, Np, Np), lambda c: (0, 0, 0)),
            pl.BlockSpec((Np, w_in), lambda c: (0, 0)),
            pl.BlockSpec((w_in, wp), lambda c: (0, 0)),
        ],
        # Per-channel output block placed by the BlockSpec (no in-kernel concatenate).
        out_specs=pl.BlockSpec((Np, wp), lambda c: (0, c)),
        compiler_params=pltpu.CompilerParams(
            dimension_semantics=("parallel",),     # channel chains shard across v7x's 2 TCs
            vmem_limit_bytes=vmem_limit,
        ),
    )(sw_flat, A_p, X_p, Wg_p)

    # Strip padding: valid rows, valid w_out columns per channel, torch.cat(dim=1) order.
    X_ = out_p[:N].reshape(N, C, wp)[:, :, :w_out].reshape(N, C * w_out)

    # Ws output matches the module: softmaxed GTConv weights per layer.
    Ws = []
    idx = 0
    for i in range(L):
        n = 2 if i == 0 else 1
        Ws.append([sw[idx + k] for k in range(n)])
        idx += n
    return X_, Ws


# ---------------------------------------------------------------------------
# Pure-JAX f32 reference (silent correctness check)
# ---------------------------------------------------------------------------
def _ref_norm(H, add):
    N = H.shape[0]
    eye = jnp.eye(N, dtype=H.dtype)
    Hm = H * (1.0 - eye)
    if add:
        Hm = Hm + eye
    deg = jnp.sum(Hm, axis=0)
    deg_inv = 1.0 / (deg + 1e-8)
    deg_inv = jnp.where(deg == 0.0, 0.0, deg_inv)
    return Hm * deg_inv[None, :]


def ref_forward(A, X, conv_weights, gcn_weight):
    H = None
    for i, ws in enumerate(conv_weights):
        sws = [jax.nn.softmax(w, axis=1) for w in ws]
        if i == 0:
            a = jnp.einsum('ce,enm->cnm', sws[0], A)
            b = jnp.einsum('ce,enm->cnm', sws[1], A)
            H = jnp.einsum('cnk,ckm->cnm', a, b)
        else:
            a = jnp.einsum('ce,enm->cnm', sws[0], A)
            Hn = jnp.stack([_ref_norm(H[c], False) for c in range(H.shape[0])])
            H = jnp.einsum('cnk,ckm->cnm', Hn, a)
    XW = X @ gcn_weight
    outs = []
    for c in range(H.shape[0]):
        Hn = _ref_norm(H[c], True)
        outs.append(jnp.maximum(Hn.T @ XW, 0.0))
    return jnp.concatenate(outs, axis=1)


# ---------------------------------------------------------------------------
if __name__ == "__main__":
    key = jax.random.PRNGKey(0)
    etypes = ["rel_a", "rel_b"]
    E = len(etypes) + 1          # num_edge (identity appended as last channel)
    C = 2                        # num_channels
    N = 16                       # number of nodes
    w_in, w_out = 32, 16
    num_layers = 2

    k1, k2, k3, k4 = jax.random.split(key, 4)

    # Synthetic dense adjacency per etype + identity channel -> [E, N, N]
    adjs = (jax.random.uniform(k1, (len(etypes), N, N)) < 0.3).astype(jnp.float32)
    A = jnp.concatenate([adjs, jnp.eye(N, dtype=jnp.float32)[None]], axis=0)

    # Node features
    X = jax.random.normal(k2, (N, w_in), dtype=jnp.float32)

    # GTConv weights: module initializes to 0.1; add a small deterministic perturbation so
    # channels/edges differ (exercises the per-channel SMEM indexing and output placement).
    n_sets = num_layers + 1
    wkeys = jax.random.split(k4, n_sets)
    all_w = [0.1 + 0.05 * jax.random.normal(wkeys[i], (C, E), dtype=jnp.float32)
             for i in range(n_sets)]
    conv_weights = [[all_w[0], all_w[1]]] + [[all_w[2 + i]] for i in range(num_layers - 1)]

    # GTN.weight: xavier_uniform_([w_in, w_out]); GTN.bias is zeros and unused here.
    bound = math.sqrt(6.0 / (w_in + w_out))
    gcn_weight = jax.random.uniform(k3, (w_in, w_out), jnp.float32, -bound, bound)

    X_, Ws = gtn_forward(A, X, conv_weights, gcn_weight)
    X_ = jax.block_until_ready(X_)

    # Silent numeric check against the pure-f32 reference.  Tolerance loosened because the
    # kernel uses bf16 MXU operands (f32 accumulation) and approx reciprocal on the EUP.
    X_ref = ref_forward(A, X, conv_weights, gcn_weight)
    np.testing.assert_allclose(np.asarray(X_), np.asarray(X_ref), rtol=5e-2, atol=5e-2)

    print("KERNEL_OK")
</pallas_src>

<mosaic_0001>
module attributes {stable_mosaic.version = 11 : i64} {
  func.func @gtn_channel_kernel(%arg0: i32, %arg1: memref<18xf32, #tpu.memory_space<smem>>, %arg2: memref<3x128x128xf32, #tpu.memory_space<vmem>>, %arg3: memref<128x32xf32, #tpu.memory_space<vmem>>, %arg4: memref<32x128xf32, #tpu.memory_space<vmem>>, %arg5: memref<128x128xf32, #tpu.memory_space<vmem>>) attributes {dimension_semantics = [#tpu.dimension_semantics<parallel>], iteration_bounds = array<i64: 2>, scalar_prefetch = 0 : i64, scratch_operands = 0 : i64, tpu.core_type = #tpu.core_type<tc>, window_params = [{transform_indices = @transform_0, window_bounds = array<i64: 18>}, {pipeline_mode = #tpu.pipeline_mode<synchronous>, transform_indices = @transform_1, window_bounds = array<i64: 3, 128, 128>}, {pipeline_mode = #tpu.pipeline_mode<synchronous>, transform_indices = @transform_2, window_bounds = array<i64: 128, 32>}, {pipeline_mode = #tpu.pipeline_mode<synchronous>, transform_indices = @transform_3, window_bounds = array<i64: 32, 128>}, {transform_indices = @transform_4, window_bounds = array<i64: 128, 128>}]} {
    %c0 = arith.constant 0 : index
    %c0_0 = arith.constant 0 : index
    %c0_1 = arith.constant 0 : index
    %0 = vector.load %arg2[%c0, %c0_0, %c0_1] : memref<3x128x128xf32, #tpu.memory_space<vmem>>, vector<1x128x128xf32>
    %1 = vector.shape_cast %0 : vector<1x128x128xf32> to vector<128x128xf32>
    %c1 = arith.constant 1 : index
    %c0_2 = arith.constant 0 : index
    %c0_3 = arith.constant 0 : index
    %2 = vector.load %arg2[%c1, %c0_2, %c0_3] : memref<3x128x128xf32, #tpu.memory_space<vmem>>, vector<1x128x128xf32>
    %3 = vector.shape_cast %2 : vector<1x128x128xf32> to vector<128x128xf32>
    %c2 = arith.constant 2 : index
    %c0_4 = arith.constant 0 : index
    %c0_5 = arith.constant 0 : index
    %4 = vector.load %arg2[%c2, %c0_4, %c0_5] : memref<3x128x128xf32, #tpu.memory_space<vmem>>, vector<1x128x128xf32>
    %5 = vector.shape_cast %4 : vector<1x128x128xf32> to vector<128x128xf32>
    %6 = tpu.iota {dimensions = array<i32: 0>} : vector<128x128xi32>
    %7 = tpu.iota {dimensions = array<i32: 1>} : vector<128x128xi32>
    %8 = arith.cmpi eq, %6, %7 : vector<128x128xi32>
    %9 = arith.extui %8 : vector<128x128xi1> to vector<128x128xi32>
    %10 = arith.sitofp %9 : vector<128x128xi32> to vector<128x128xf32>
    %cst = arith.constant 1.000000e+00 : f32
    %11 = vector.broadcast %cst : f32 to vector<128x128xf32>
    %12 = arith.subf %11, %10 : vector<128x128xf32>
    %c0_i32 = arith.constant 0 : i32
    %13 = arith.addi %c0_i32, %arg0 : i32
    %c3_i32 = arith.constant 3 : i32
    %14 = arith.muli %13, %c3_i32 : i32
    %c0_i32_6 = arith.constant 0 : i32
    %15 = arith.addi %14, %c0_i32_6 : i32
    %16 = arith.index_cast %15 : i32 to index
    %17 = memref.load %arg1[%16] : memref<18xf32, #tpu.memory_space<smem>>
    %18 = vector.broadcast %17 : f32 to vector<128x128xf32>
    %19 = arith.mulf %18, %1 : vector<128x128xf32>
    %c0_i32_7 = arith.constant 0 : i32
    %20 = arith.addi %c0_i32_7, %arg0 : i32
    %c3_i32_8 = arith.constant 3 : i32
    %21 = arith.muli %20, %c3_i32_8 : i32
    %c1_i32 = arith.constant 1 : i32
    %22 = arith.addi %21, %c1_i32 : i32
    %23 = arith.index_cast %22 : i32 to index
    %24 = memref.load %arg1[%23] : memref<18xf32, #tpu.memory_space<smem>>
    %25 = vector.broadcast %24 : f32 to vector<128x128xf32>
    %26 = arith.mulf %25, %3 : vector<128x128xf32>
    %27 = arith.addf %19, %26 : vector<128x128xf32>
    %c0_i32_9 = arith.constant 0 : i32
    %28 = arith.addi %c0_i32_9, %arg0 : i32
    %c3_i32_10 = arith.constant 3 : i32
    %29 = arith.muli %28, %c3_i32_10 : i32
    %c2_i32 = arith.constant 2 : i32
    %30 = arith.addi %29, %c2_i32 : i32
    %31 = arith.index_cast %30 : i32 to index
    %32 = memref.load %arg1[%31] : memref<18xf32, #tpu.memory_space<smem>>
    %33 = vector.broadcast %32 : f32 to vector<128x128xf32>
    %34 = arith.mulf %33, %5 : vector<128x128xf32>
    %35 = arith.addf %27, %34 : vector<128x128xf32>
    %c2_i32_11 = arith.constant 2 : i32
    %36 = arith.addi %c2_i32_11, %arg0 : i32
    %c3_i32_12 = arith.constant 3 : i32
    %37 = arith.muli %36, %c3_i32_12 : i32
    %c0_i32_13 = arith.constant 0 : i32
    %38 = arith.addi %37, %c0_i32_13 : i32
    %39 = arith.index_cast %38 : i32 to index
    %40 = memref.load %arg1[%39] : memref<18xf32, #tpu.memory_space<smem>>
    %41 = vector.broadcast %40 : f32 to vector<128x128xf32>
    %42 = arith.mulf %41, %1 : vector<128x128xf32>
    %c2_i32_14 = arith.constant 2 : i32
    %43 = arith.addi %c2_i32_14, %arg0 : i32
    %c3_i32_15 = arith.constant 3 : i32
    %44 = arith.muli %43, %c3_i32_15 : i32
    %c1_i32_16 = arith.constant 1 : i32
    %45 = arith.addi %44, %c1_i32_16 : i32
    %46 = arith.index_cast %45 : i32 to index
    %47 = memref.load %arg1[%46] : memref<18xf32, #tpu.memory_space<smem>>
    %48 = vector.broadcast %47 : f32 to vector<128x128xf32>
    %49 = arith.mulf %48, %3 : vector<128x128xf32>
    %50 = arith.addf %42, %49 : vector<128x128xf32>
    %c2_i32_17 = arith.constant 2 : i32
    %51 = arith.addi %c2_i32_17, %arg0 : i32
    %c3_i32_18 = arith.constant 3 : i32
    %52 = arith.muli %51, %c3_i32_18 : i32
    %c2_i32_19 = arith.constant 2 : i32
    %53 = arith.addi %52, %c2_i32_19 : i32
    %54 = arith.index_cast %53 : i32 to index
    %55 = memref.load %arg1[%54] : memref<18xf32, #tpu.memory_space<smem>>
    %56 = vector.broadcast %55 : f32 to vector<128x128xf32>
    %57 = arith.mulf %56, %5 : vector<128x128xf32>
    %58 = arith.addf %50, %57 : vector<128x128xf32>
    %59 = arith.truncf %35 : vector<128x128xf32> to vector<128x128xbf16>
    %60 = arith.truncf %58 : vector<128x128xf32> to vector<128x128xbf16>
    %cst_20 = arith.constant dense<0.000000e+00> : vector<128x128xf32>
    %61 = tpu.matmul %59, %60, %cst_20 {dimension_numbers = #tpu.dot_dimension_numbers<[1], [0], [0], [1], [0, 0, 1, 1], [], []>} : vector<128x128xbf16>, vector<128x128xbf16>, vector<128x128xf32> -> vector<128x128xf32>
    %c4_i32 = arith.constant 4 : i32
    %62 = arith.addi %c4_i32, %arg0 : i32
    %c3_i32_21 = arith.constant 3 : i32
    %63 = arith.muli %62, %c3_i32_21 : i32
    %c0_i32_22 = arith.constant 0 : i32
    %64 = arith.addi %63, %c0_i32_22 : i32
    %65 = arith.index_cast %64 : i32 to index
    %66 = memref.load %arg1[%65] : memref<18xf32, #tpu.memory_space<smem>>
    %67 = vector.broadcast %66 : f32 to vector<128x128xf32>
    %68 = arith.mulf %67, %1 : vector<128x128xf32>
    %c4_i32_23 = arith.constant 4 : i32
    %69 = arith.addi %c4_i32_23, %arg0 : i32
    %c3_i32_24 = arith.constant 3 : i32
    %70 = arith.muli %69, %c3_i32_24 : i32
    %c1_i32_25 = arith.constant 1 : i32
    %71 = arith.addi %70, %c1_i32_25 : i32
    %72 = arith.index_cast %71 : i32 to index
    %73 = memref.load %arg1[%72] : memref<18xf32, #tpu.memory_space<smem>>
    %74 = vector.broadcast %73 : f32 to vector<128x128xf32>
    %75 = arith.mulf %74, %3 : vector<128x128xf32>
    %76 = arith.addf %68, %75 : vector<128x128xf32>
    %c4_i32_26 = arith.constant 4 : i32
    %77 = arith.addi %c4_i32_26, %arg0 : i32
    %c3_i32_27 = arith.constant 3 : i32
    %78 = arith.muli %77, %c3_i32_27 : i32
    %c2_i32_28 = arith.constant 2 : i32
    %79 = arith.addi %78, %c2_i32_28 : i32
    %80 = arith.index_cast %79 : i32 to index
    %81 = memref.load %arg1[%80] : memref<18xf32, #tpu.memory_space<smem>>
    %82 = vector.broadcast %81 : f32 to vector<128x128xf32>
    %83 = arith.mulf %82, %5 : vector<128x128xf32>
    %84 = arith.addf %76, %83 : vector<128x128xf32>
    %85 = arith.mulf %61, %12 : vector<128x128xf32>
    %cst_29 = arith.constant dense<0.000000e+00> : vector<128xf32>
    %86 = vector.multi_reduction <add>, %85, %cst_29 [0] : vector<128x128xf32> to vector<128xf32>
    %87 = vector.shape_cast %86 : vector<128xf32> to vector<1x128xf32>
    %cst_30 = arith.constant 0.000000e+00 : f32
    %88 = vector.broadcast %cst_30 : f32 to vector<1x128xf32>
    %89 = arith.cmpf oeq, %87, %88 : vector<1x128xf32>
    %cst_31 = arith.constant 9.99999993E-9 : f32
    %90 = vector.broadcast %cst_31 : f32 to vector<1x128xf32>
    %91 = arith.addf %87, %90 : vector<1x128xf32>
    %92 = tpu.reciprocal %91 {approx = true} : vector<1x128xf32> -> vector<1x128xf32>
    %cst_32 = arith.constant 0.000000e+00 : f32
    %93 = vector.broadcast %cst_32 : f32 to vector<1x128xf32>
    %94 = arith.select %89, %93, %92 : vector<1x128xi1>, vector<1x128xf32>
    %95 = vector.broadcast %94 : vector<1x128xf32> to vector<128x128xf32>
    %96 = arith.mulf %85, %95 : vector<128x128xf32>
    %97 = arith.truncf %96 : vector<128x128xf32> to vector<128x128xbf16>
    %98 = arith.truncf %84 : vector<128x128xf32> to vector<128x128xbf16>
    %cst_33 = arith.constant dense<0.000000e+00> : vector<128x128xf32>
    %99 = tpu.matmul %97, %98, %cst_33 {dimension_numbers = #tpu.dot_dimension_numbers<[1], [0], [0], [1], [0, 0, 1, 1], [], []>} : vector<128x128xbf16>, vector<128x128xbf16>, vector<128x128xf32> -> vector<128x128xf32>
    %c0_34 = arith.constant 0 : index
    %c0_35 = arith.constant 0 : index
    %100 = vector.load %arg3[%c0_34, %c0_35] : memref<128x32xf32, #tpu.memory_space<vmem>>, vector<128x32xf32>
    %101 = arith.truncf %100 : vector<128x32xf32> to vector<128x32xbf16>
    %c0_36 = arith.constant 0 : index
    %c0_37 = arith.constant 0 : index
    %102 = vector.load %arg4[%c0_36, %c0_37] : memref<32x128xf32, #tpu.memory_space<vmem>>, vector<32x128xf32>
    %103 = arith.truncf %102 : vector<32x128xf32> to vector<32x128xbf16>
    %cst_38 = arith.constant dense<0.000000e+00> : vector<128x128xf32>
    %104 = tpu.matmul %101, %103, %cst_38 {dimension_numbers = #tpu.dot_dimension_numbers<[1], [0], [0], [1], [0, 0, 1, 1], [], []>} : vector<128x32xbf16>, vector<32x128xbf16>, vector<128x128xf32> -> vector<128x128xf32>
    %105 = arith.mulf %99, %12 : vector<128x128xf32>
    %106 = arith.addf %105, %10 : vector<128x128xf32>
    %cst_39 = arith.constant dense<0.000000e+00> : vector<128xf32>
    %107 = vector.multi_reduction <add>, %106, %cst_39 [0] : vector<128x128xf32> to vector<128xf32>
    %108 = vector.shape_cast %107 : vector<128xf32> to vector<1x128xf32>
    %cst_40 = arith.constant 0.000000e+00 : f32
    %109 = vector.broadcast %cst_40 : f32 to vector<1x128xf32>
    %110 = arith.cmpf oeq, %108, %109 : vector<1x128xf32>
    %cst_41 = arith.constant 9.99999993E-9 : f32
    %111 = vector.broadcast %cst_41 : f32 to vector<1x128xf32>
    %112 = arith.addf %108, %111 : vector<1x128xf32>
    %113 = tpu.reciprocal %112 {approx = true} : vector<1x128xf32> -> vector<1x128xf32>
    %cst_42 = arith.constant 0.000000e+00 : f32
    %114 = vector.broadcast %cst_42 : f32 to vector<1x128xf32>
    %115 = arith.select %110, %114, %113 : vector<1x128xi1>, vector<1x128xf32>
    %116 = vector.broadcast %115 : vector<1x128xf32> to vector<128x128xf32>
    %117 = arith.mulf %106, %116 : vector<128x128xf32>
    %118 = arith.truncf %117 : vector<128x128xf32> to vector<128x128xbf16>
    %119 = arith.truncf %104 : vector<128x128xf32> to vector<128x128xbf16>
    %cst_43 = arith.constant dense<0.000000e+00> : vector<128x128xf32>
    %120 = tpu.matmul %118, %119, %cst_43 {dimension_numbers = #tpu.dot_dimension_numbers<[0], [0], [1], [1], [0, 1, 1, 1], [], []>} : vector<128x128xbf16>, vector<128x128xbf16>, vector<128x128xf32> -> vector<128x128xf32>
    %cst_44 = arith.constant 0.000000e+00 : f32
    %121 = vector.broadcast %cst_44 : f32 to vector<128x128xf32>
    %122 = arith.maximumf %120, %121 : vector<128x128xf32>
    %c0_45 = arith.constant 0 : index
    %c0_46 = arith.constant 0 : index
    %123 = vector.load %arg5[%c0_45, %c0_46] : memref<128x128xf32, #tpu.memory_space<vmem>>, vector<128x128xf32>
    tpu.vector_store %arg5[%c0_45, %c0_46], %122 {strides = array<i32>} : memref<128x128xf32, #tpu.memory_space<vmem>>, vector<128x128xf32>,
    return
  }
  func.func @transform_0(%arg0: i32) -> i32 {
    %c0_i32 = arith.constant 0 : i32
    %c0_i32_0 = arith.constant 0 : i32
    return %c0_i32 : i32
  }
  func.func @transform_1(%arg0: i32) -> (i32, i32, i32) {
    %c0_i32 = arith.constant 0 : i32
    %c0_i32_0 = arith.constant 0 : i32
    %c0_i32_1 = arith.constant 0 : i32
    %c0_i32_2 = arith.constant 0 : i32
    return %c0_i32, %c0_i32_0, %c0_i32_1 : i32, i32, i32
  }
  func.func @transform_2(%arg0: i32) -> (i32, i32) {
    %c0_i32 = arith.constant 0 : i32
    %c0_i32_0 = arith.constant 0 : i32
    %c0_i32_1 = arith.constant 0 : i32
    return %c0_i32, %c0_i32_0 : i32, i32
  }
  func.func @transform_3(%arg0: i32) -> (i32, i32) {
    %c0_i32 = arith.constant 0 : i32
    %c0_i32_0 = arith.constant 0 : i32
    %c0_i32_1 = arith.constant 0 : i32
    return %c0_i32, %c0_i32_0 : i32, i32
  }
  func.func @transform_4(%arg0: i32) -> (i32, i32) {
    %c0_i32 = arith.constant 0 : i32
    %c0_i32_0 = arith.constant 0 : i32
    return %c0_i32, %arg0 : i32, i32
  }
}

</mosaic_0001>

<llo_original>
// kernel: tpu_custom_call.1
$region0: #{tpu_custom_call.1}
  #allocation0 [shape = 'u32[]', space=smem, size = 0x4, offset = 0x4, fixed_abs, tag = 'smem constant byte address 0x4 - core index']
  #allocation1 [shape = 'u32[72,128]{1,0:T(1,128)}', space=vmem, size = 0x9000, scoped, tag = 'internal scratch']
  %s0 = inlined_call_operand.vmem [shape: f32[18], index: 0, kind: input, shape index: {}]
  %s1 = inlined_call_operand.hbm [shape: f32[3,128,128], index: 1, kind: input, shape index: {}]
  %s2 = inlined_call_operand.vmem [shape: f32[128,32], index: 2, kind: input, shape index: {}]
  %s3 = inlined_call_operand.vmem [shape: f32[32,128], index: 3, kind: input, shape index: {}]
  %s4 = inlined_call_operand.hbm [shape: f32[128,256], index: 4, kind: output, shape index: {}]
  %s5 = sld [smem:[#allocation0]]
  $region57: #{tpu_custom_call.1} parent=0
    _
  %s7 = ssub.s32 1, %s5
  %s8 = scalar_select 0, %s7, %s5
  $region1: #{tpu_custom_call.1} parent=0
    #allocation2 [shape = 'u8[512]{0}', space=smem, size = 0x200, scoped, tag = 'input window, operand 0, single buffered']
    #allocation3 [shape = 's32[2]{0}', space=sflag, size = 0x8, scoped, tag = 'scoped memory for tpu_custom_call.1']
    #allocation4 [shape = 's32[2]{0}', space=sflag, size = 0x8, scoped, tag = 'scoped memory for tpu_custom_call.1']
    #allocation5 [shape = 's32[2]{0}', space=sflag, size = 0x8, scoped, tag = 'scoped memory for tpu_custom_call.1']
    #allocation6 [shape = 'u8[196608]{0}', space=vmem, size = 0x30000, scoped, tag = 'input window, operand 1, single buffered']
    #allocation7 [shape = 'u8[131072]{0}', space=vmem, size = 0x20000, scoped, tag = 'output window, operand 0']
    %9 = vsyncpa [#allocation5], 0
    %10 = vsyncpa [#allocation3], 0
    %11 = vsyncpa [#allocation4], 0
    %s12 = scalar_lea.sflag [#allocation4], 1
    %13 = vsyncpa %s12, 0
    loop: start=0, step=1, limit=4
    $region2: #{tpu_custom_call.1} parent=1 // loop_pre_header
      _
    $region3: #{tpu_custom_call.1} parent=1 // loop_header
      %s15 = sphi 0, %s19
      %p16 = scmp.ge.s32.totalorder %s15, 4
      %s23 = sphi 0, %s23
      %s25 = sphi 0, %s23
      %s26 = sphi 0, %s25
      %s40 = sphi 0, %s26
      %s44 = sphi 0, %s44
      %s46 = sphi 0, %s44
      %s47 = sphi 0, %s46
      %s61 = sphi 0, %s47
      %s65 = sphi 0, %s65
      %s67 = sphi 0, %s65
      %s68 = sphi 0, %s67
      %s82 = sphi 0, %s68
      %s86 = sphi 0, %s86
      %s88 = sphi 0, %s86
      %s89 = sphi 0, %s88
      %s103 = sphi 0, %s89
      %s109 = sphi 0, %s111
      %s112 = sphi 0, %s109
      %s113 = sphi 0, %s112
      %s129 = sphi 0, %s113
    $region4: #{tpu_custom_call.1} parent=1 // loop_header_branch
      %18 = sbr.rel (%p16) target = $region8
    $region5: #{tpu_custom_call.1} parent=1 // loop_body
      %s20 = ssub.s32 %s15, 1
      %s21 = ssub.s32 %s15, 2
      %s22 = sadd.s32 %s15, 1
      %s24 = sadd.s32 %s23, 1
      %p27 = scmp.eq.s32.totalorder %s15, 1
      %p28 = scmp.ne.s32.totalorder %s23, %s25
      %p29 = scmp.eq.s32.totalorder %s15, 0
      %p30 = por %p28, %p29
      %p31 = scmp.ne.s32.totalorder %s23, %s25
      %p32 = scmp.eq.s32.totalorder %s20, 1
      %p33 = por %p31, %p32
      %p34 = scmp.ne.s32.totalorder %s25, %s26
      %p35 = scmp.eq.s32.totalorder %s20, 0
      %p36 = por %p34, %p35
      %p37 = scmp.ne.s32.totalorder %s25, %s26
      %p38 = scmp.eq.s32.totalorder %s21, 1
      %p39 = por %p37, %p38
      %p41 = scmp.ne.s32.totalorder %s26, %s40
      %p42 = scmp.eq.s32.totalorder %s21, 0
      %p43 = por %p41, %p42
      %s45 = sadd.s32 %s44, 1
      %p48 = scmp.eq.s32.totalorder %s15, 1
      %p49 = scmp.ne.s32.totalorder %s44, %s46
      %p50 = scmp.eq.s32.totalorder %s15, 0
      %p51 = por %p49, %p50
      %p52 = scmp.ne.s32.totalorder %s44, %s46
      %p53 = scmp.eq.s32.totalorder %s20, 1
      %p54 = por %p52, %p53
      %p55 = scmp.ne.s32.totalorder %s46, %s47
      %p56 = scmp.eq.s32.totalorder %s20, 0
      %p57 = por %p55, %p56
      %p58 = scmp.ne.s32.totalorder %s46, %s47
      %p59 = scmp.eq.s32.totalorder %s21, 1
      %p60 = por %p58, %p59
      %p62 = scmp.ne.s32.totalorder %s47, %s61
      %p63 = scmp.eq.s32.totalorder %s21, 0
      %p64 = por %p62, %p63
      %s66 = sadd.s32 %s65, 1
      %p69 = scmp.eq.s32.totalorder %s15, 1
      %p70 = scmp.ne.s32.totalorder %s65, %s67
      %p71 = scmp.eq.s32.totalorder %s15, 0
      %p72 = por %p70, %p71
      %p73 = scmp.ne.s32.totalorder %s65, %s67
      %p74 = scmp.eq.s32.totalorder %s20, 1
      %p75 = por %p73, %p74
      %p76 = scmp.ne.s32.totalorder %s67, %s68
      %p77 = scmp.eq.s32.totalorder %s20, 0
      %p78 = por %p76, %p77
      %p79 = scmp.ne.s32.totalorder %s67, %s68
      %p80 = scmp.eq.s32.totalorder %s21, 1
      %p81 = por %p79, %p80
      %p83 = scmp.ne.s32.totalorder %s68, %s82
      %p84 = scmp.eq.s32.totalorder %s21, 0
      %p85 = por %p83, %p84
      %s87 = sadd.s32 %s86, 1
      %p90 = scmp.eq.s32.totalorder %s15, 1
      %p91 = scmp.ne.s32.totalorder %s86, %s88
      %p92 = scmp.eq.s32.totalorder %s15, 0
      %p93 = por %p91, %p92
      %p94 = scmp.ne.s32.totalorder %s86, %s88
      %p95 = scmp.eq.s32.totalorder %s20, 1
      %p96 = por %p94, %p95
      %p97 = scmp.ne.s32.totalorder %s88, %s89
      %p98 = scmp.eq.s32.totalorder %s20, 0
      %p99 = por %p97, %p98
      %p100 = scmp.ne.s32.totalorder %s88, %s89
      %p101 = scmp.eq.s32.totalorder %s21, 1
      %p102 = por %p100, %p101
      %p104 = scmp.ne.s32.totalorder %s89, %s103
      %p105 = scmp.eq.s32.totalorder %s21, 0
      %p106 = por %p104, %p105
      %s107 = ssub.s32 %s15, %s22
      %p108 = scmp.eq.s32.totalorder %s107, 0
      %s110 = sadd.s32 %s109, 1
      %s111 = scalar_select %p108, %s109, %s110
      %p114 = pneg %p108
      %p115 = scmp.eq.s32.totalorder %s15, 1
      %p116 = por %p114, %p115
      %p117 = scmp.ne.s32.totalorder %s109, %s112
      %p118 = scmp.eq.s32.totalorder %s15, 0
      %p119 = por %p117, %p118
      %p120 = scmp.ne.s32.totalorder %s109, %s112
      %p121 = scmp.eq.s32.totalorder %s20, 1
      %p122 = por %p120, %p121
      %p123 = scmp.ne.s32.totalorder %s112, %s113
      %p124 = scmp.eq.s32.totalorder %s20, 0
      %p125 = por %p123, %p124
      %p126 = scmp.ne.s32.totalorder %s112, %s113
      %p127 = scmp.eq.s32.totalorder %s21, 1
      %p128 = por %p126, %p127
      %p130 = scmp.ne.s32.totalorder %s113, %s129
      %p131 = scmp.eq.s32.totalorder %s21, 0
      %p132 = por %p130, %p131
      %p133 = scmp.le.s32.totalorder 1, %s15
      %p134 = scmp.lt.s32.totalorder %s15, 3
      %p135 = pnand %p133, %p134
      %p136 = pneg %p135
      // Predicated region
      $region9: #{tpu_custom_call.1} parent=5 // pred_check
        _
      $region10: #{tpu_custom_call.1} parent=5 // pred_check_branch
        %138 = sbr.rel (%p135) target = $region12
      $region11: #{tpu_custom_call.1} parent=5 // pred_region
        %s139 = ssub.s32 %s15, 1
        // Predicated region
        $region13: #{tpu_custom_call.1} parent=11 // pred_check
          %p140 = pneg %p36
        $region14: #{tpu_custom_call.1} parent=11 // pred_check_branch
          %142 = sbr.rel (%p140) target = $region16
        $region15: #{tpu_custom_call.1} parent=11 // pred_region
          %144 = vsyncadd [#allocation5], 0
          %s146 = sshll.u32 %s0, 4
          %s147 = int_to_ptr.vmem [resolvable:$true] %s146
          %149 = dma.vmem_to_smem %s147, 16, [#allocation2], [#allocation5]
        $region16: #{tpu_custom_call.1} parent=11 // pred_fallthru
          _
        // Predicated region
        $region17: #{tpu_custom_call.1} parent=11 // pred_check
          %p150 = pneg %p57
        $region18: #{tpu_custom_call.1} parent=11 // pred_check_branch
          %152 = sbr.rel (%p150) target = $region20
        $region19: #{tpu_custom_call.1} parent=11 // pred_region
          %154 = vsyncadd [#allocation3], 0
          %s155 = sshll.u32 %s1, 4
          %s156 = int_to_ptr.hbm [resolvable:$true] %s155
          %s157 = sshll.u32 [#allocation6], 4
          %s158 = int_to_ptr.vmem [resolvable:$true] %s157
          %163 = dma.hbm_to_vmem [thread:$0]  %s156, 6144, %s158, [#allocation3], 128, 128, 8
        $region20: #{tpu_custom_call.1} parent=11 // pred_fallthru
          _
        // Predicated region
        $region21: #{tpu_custom_call.1} parent=11 // pred_check
          %p164 = pneg %p78
        $region22: #{tpu_custom_call.1} parent=11 // pred_check_branch
          %166 = sbr.rel (%p164) target = $region24
        $region23: #{tpu_custom_call.1} parent=11 // pred_region
          _
        $region24: #{tpu_custom_call.1} parent=11 // pred_fallthru
          _
        // Predicated region
        $region25: #{tpu_custom_call.1} parent=11 // pred_check
          %p167 = pneg %p99
        $region26: #{tpu_custom_call.1} parent=11 // pred_check_branch
          %169 = sbr.rel (%p167) target = $region28
        $region27: #{tpu_custom_call.1} parent=11 // pred_region
          _
        $region28: #{tpu_custom_call.1} parent=11 // pred_fallthru
          _
      $region12: #{tpu_custom_call.1} parent=5 // pred_fallthru
        _
      %p170 = scmp.lt.s32.totalorder %s15, 2
      // Predicated region
      $region29: #{tpu_custom_call.1} parent=5 // pred_check
        %p171 = pneg %p170
      $region30: #{tpu_custom_call.1} parent=5 // pred_check_branch
        %173 = sbr.rel (%p171) target = $region32
      $region31: #{tpu_custom_call.1} parent=5 // pred_region
        _
      $region32: #{tpu_custom_call.1} parent=5 // pred_fallthru
        _
      %p174 = scmp.le.s32.totalorder 1, %s15
      %p175 = scmp.lt.s32.totalorder %s15, 3
      %p176 = pnand %p174, %p175
      %p177 = pneg %p176
      // Predicated region
      $region33: #{tpu_custom_call.1} parent=5 // pred_check
        _
      $region34: #{tpu_custom_call.1} parent=5 // pred_check_branch
        %179 = sbr.rel (%p176) target = $region36
      $region35: #{tpu_custom_call.1} parent=5 // pred_region
        %s180 = ssub.s32 %s15, 1
        // Predicated region
        $region37: #{tpu_custom_call.1} parent=35 // pred_check
          %p181 = pneg %p36
        $region38: #{tpu_custom_call.1} parent=35 // pred_check_branch
          %183 = sbr.rel (%p181) target = $region40
        $region39: #{tpu_custom_call.1} parent=35 // pred_region
          %185 = dma.done [#allocation5], 16
        $region40: #{tpu_custom_call.1} parent=35 // pred_fallthru
          _
        // Predicated region
        $region41: #{tpu_custom_call.1} parent=35 // pred_check
          %p186 = pneg %p57
        $region42: #{tpu_custom_call.1} parent=35 // pred_check_branch
          %188 = sbr.rel (%p186) target = $region44
        $region43: #{tpu_custom_call.1} parent=35 // pred_region
          %190 = dma.done [#allocation3], 6144
        $region44: #{tpu_custom_call.1} parent=35 // pred_fallthru
          _
        %191 = sfence
        %p192 = pneg %p36
        %p193 = pneg %p33
        %p194 = pneg %p57
        %p195 = pneg %p54
        %p196 = pneg %p78
        %p197 = pneg %p75
        %p198 = pneg %p99
        %p199 = pneg %p96
        %p200 = pneg %p125
        %p201 = pneg %p122
        %s202 = sand.u32 %s112, 1
        %s203 = scalar_lea.sflag [#allocation4], %s202
        %s204 = sand.u32 %s112, 1
        %s205 = smul.addr %s204, 128
        %s206 = scalar_lea.vmem [#allocation7], %s205
        %v208 = vld [vmem:[#allocation6] sm:$0xff]
        %v209 = vld [vmem:[#allocation6 + $0x8] sm:$0xff]
        %v210 = vld [vmem:[#allocation6 + $0x10] sm:$0xff]
        %v211 = vld [vmem:[#allocation6 + $0x18] sm:$0xff]
        %v212 = vld [vmem:[#allocation6 + $0x20] sm:$0xff]
        %v213 = vld [vmem:[#allocation6 + $0x28] sm:$0xff]
        %v214 = vld [vmem:[#allocation6 + $0x30] sm:$0xff]
        %v215 = vld [vmem:[#allocation6 + $0x38] sm:$0xff]
        %v216 = vld [vmem:[#allocation6 + $0x40] sm:$0xff]
        %v217 = vld [vmem:[#allocation6 + $0x48] sm:$0xff]
        %v218 = vld [vmem:[#allocation6 + $0x50] sm:$0xff]
        %v219 = vld [vmem:[#allocation6 + $0x58] sm:$0xff]
        %v220 = vld [vmem:[#allocation6 + $0x60] sm:$0xff]
        %v221 = vld [vmem:[#allocation6 + $0x68] sm:$0xff]
        %v222 = vld [vmem:[#allocation6 + $0x70] sm:$0xff]
        %v223 = vld [vmem:[#allocation6 + $0x78] sm:$0xff]
        %s224 = scalar_lea.vmem [#allocation6], 128
        %v225 = vld [vmem:[%s224] sm:$0xff]
        %v226 = vld [vmem:[%s224 + $0x8] sm:$0xff]
        %v227 = vld [vmem:[%s224 + $0x10] sm:$0xff]
        %v228 = vld [vmem:[%s224 + $0x18] sm:$0xff]
        %v229 = vld [vmem:[%s224 + $0x20] sm:$0xff]
        %v230 = vld [vmem:[%s224 + $0x28] sm:$0xff]
        %v231 = vld [vmem:[%s224 + $0x30] sm:$0xff]
        %v232 = vld [vmem:[%s224 + $0x38] sm:$0xff]
        %v233 = vld [vmem:[%s224 + $0x40] sm:$0xff]
        %v234 = vld [vmem:[%s224 + $0x48] sm:$0xff]
        %v235 = vld [vmem:[%s224 + $0x50] sm:$0xff]
        %v236 = vld [vmem:[%s224 + $0x58] sm:$0xff]
        %v237 = vld [vmem:[%s224 + $0x60] sm:$0xff]
        %v238 = vld [vmem:[%s224 + $0x68] sm:$0xff]
        %v239 = vld [vmem:[%s224 + $0x70] sm:$0xff]
        %v240 = vld [vmem:[%s224 + $0x78] sm:$0xff]
        %s241 = scalar_lea.vmem [#allocation6], 256
        %v242 = vld [vmem:[%s241] sm:$0xff]
        %v243 = vld [vmem:[%s241 + $0x8] sm:$0xff]
        %v244 = vld [vmem:[%s241 + $0x10] sm:$0xff]
        %v245 = vld [vmem:[%s241 + $0x18] sm:$0xff]
        %v246 = vld [vmem:[%s241 + $0x20] sm:$0xff]
        %v247 = vld [vmem:[%s241 + $0x28] sm:$0xff]
        %v248 = vld [vmem:[%s241 + $0x30] sm:$0xff]
        %v249 = vld [vmem:[%s241 + $0x38] sm:$0xff]
        %v250 = vld [vmem:[%s241 + $0x40] sm:$0xff]
        %v251 = vld [vmem:[%s241 + $0x48] sm:$0xff]
        %v252 = vld [vmem:[%s241 + $0x50] sm:$0xff]
        %v253 = vld [vmem:[%s241 + $0x58] sm:$0xff]
        %v254 = vld [vmem:[%s241 + $0x60] sm:$0xff]
        %v255 = vld [vmem:[%s241 + $0x68] sm:$0xff]
        %v256 = vld [vmem:[%s241 + $0x70] sm:$0xff]
        %v257 = vld [vmem:[%s241 + $0x78] sm:$0xff]
        %v258 = vlaneseq
        %v259 = vshrl.u32 %v258, 7
        %v260 = vadd.s32 %v259, 8
        %v261 = vadd.s32 %v259, 16
        %v262 = vadd.s32 %v259, 24
        %v263 = vadd.s32 %v259, 32
        %v264 = vadd.s32 %v259, 40
        %v265 = vadd.s32 %v259, 48
        %v266 = vadd.s32 %v259, 56
        %v267 = vadd.s32 %v259, 64
        %v268 = vadd.s32 %v259, 72
        %v269 = vadd.s32 %v259, 80
        %v270 = vadd.s32 %v259, 88
        %v271 = vadd.s32 %v259, 96
        %v272 = vadd.s32 %v259, 104
        %v273 = vadd.s32 %v259, 112
        %v274 = vadd.s32 %v259, 120
        %v275 = vlaneseq
        %v276 = vand.u32 %v275, 127
        %vm277 = vcmp.eq.s32.totalorder %v259, %v276
        %vm278 = vcmp.eq.s32.totalorder %v260, %v276
        %vm279 = vcmp.eq.s32.totalorder %v261, %v276
        %vm280 = vcmp.eq.s32.totalorder %v262, %v276
        %vm281 = vcmp.eq.s32.totalorder %v263, %v276
        %vm282 = vcmp.eq.s32.totalorder %v264, %v276
        %vm283 = vcmp.eq.s32.totalorder %v265, %v276
        %vm284 = vcmp.eq.s32.totalorder %v266, %v276
        %vm285 = vcmp.eq.s32.totalorder %v267, %v276
        %vm286 = vcmp.eq.s32.totalorder %v268, %v276
        %vm287 = vcmp.eq.s32.totalorder %v269, %v276
        %vm288 = vcmp.eq.s32.totalorder %v270, %v276
        %vm289 = vcmp.eq.s32.totalorder %v271, %v276
        %vm290 = vcmp.eq.s32.totalorder %v272, %v276
        %vm291 = vcmp.eq.s32.totalorder %v273, %v276
        %vm292 = vcmp.eq.s32.totalorder %v274, %v276
        %v293 = vsel %vm277, 1, 0
        %v294 = vsel %vm278, 1, 0
        %v295 = vsel %vm279, 1, 0
        %v296 = vsel %vm280, 1, 0
        %v297 = vsel %vm281, 1, 0
        %v298 = vsel %vm282, 1, 0
        %v299 = vsel %vm283, 1, 0
        %v300 = vsel %vm284, 1, 0
        %v301 = vsel %vm285, 1, 0
        %v302 = vsel %vm286, 1, 0
        %v303 = vsel %vm287, 1, 0
        %v304 = vsel %vm288, 1, 0
        %v305 = vsel %vm289, 1, 0
        %v306 = vsel %vm290, 1, 0
        %v307 = vsel %vm291, 1, 0
        %v308 = vsel %vm292, 1, 0
        %v309 = vcvt.s32.f32 %v293
        %v310 = vcvt.s32.f32 %v294
        %v311 = vcvt.s32.f32 %v295
        %v312 = vcvt.s32.f32 %v296
        %v313 = vcvt.s32.f32 %v297
        %v314 = vcvt.s32.f32 %v298
        %v315 = vcvt.s32.f32 %v299
        %v316 = vcvt.s32.f32 %v300
        %v317 = vcvt.s32.f32 %v301
        %v318 = vcvt.s32.f32 %v302
        %v319 = vcvt.s32.f32 %v303
        %v320 = vcvt.s32.f32 %v304
        %v321 = vcvt.s32.f32 %v305
        %v322 = vcvt.s32.f32 %v306
        %v323 = vcvt.s32.f32 %v307
        %v324 = vcvt.s32.f32 %v308
        %v325 = vsub.f32 1.0, %v309
        %v326 = vsub.f32 1.0, %v310
        %v327 = vsub.f32 1.0, %v311
        %v328 = vsub.f32 1.0, %v312
        %v329 = vsub.f32 1.0, %v313
        %v330 = vsub.f32 1.0, %v314
        %v331 = vsub.f32 1.0, %v315
        %v332 = vsub.f32 1.0, %v316
        %v333 = vsub.f32 1.0, %v317
        %v334 = vsub.f32 1.0, %v318
        %v335 = vsub.f32 1.0, %v319
        %v336 = vsub.f32 1.0, %v320
        %v337 = vsub.f32 1.0, %v321
        %v338 = vsub.f32 1.0, %v322
        %v339 = vsub.f32 1.0, %v323
        %v340 = vsub.f32 1.0, %v324
        %s341 = smul.u32 %s20, 3
        %s342 = sld [smem:[#allocation2 + %s341]]
        %v343 = vstv %s342
        %v344 = vmul.f32 %v343, %v208
        %v345 = vmul.f32 %v343, %v209
        %v346 = vmul.f32 %v343, %v210
        %v347 = vmul.f32 %v343, %v211
        %v348 = vmul.f32 %v343, %v212
        %v349 = vmul.f32 %v343, %v213
        %v350 = vmul.f32 %v343, %v214
        %v351 = vmul.f32 %v343, %v215
        %v352 = vmul.f32 %v343, %v216
        %v353 = vmul.f32 %v343, %v217
        %v354 = vmul.f32 %v343, %v218
        %v355 = vmul.f32 %v343, %v219
        %v356 = vmul.f32 %v343, %v220
        %v357 = vmul.f32 %v343, %v221
        %v358 = vmul.f32 %v343, %v222
        %v359 = vmul.f32 %v343, %v223
        %s360 = sadd.s32 %s341, 1
        %s361 = sld [smem:[#allocation2 + %s360]]
        %v362 = vstv %s361
        %v363 = vmul.f32 %v362, %v225
        %v364 = vmul.f32 %v362, %v226
        %v365 = vmul.f32 %v362, %v227
        %v366 = vmul.f32 %v362, %v228
        %v367 = vmul.f32 %v362, %v229
        %v368 = vmul.f32 %v362, %v230
        %v369 = vmul.f32 %v362, %v231
        %v370 = vmul.f32 %v362, %v232
        %v371 = vmul.f32 %v362, %v233
        %v372 = vmul.f32 %v362, %v234
        %v373 = vmul.f32 %v362, %v235
        %v374 = vmul.f32 %v362, %v236
        %v375 = vmul.f32 %v362, %v237
        %v376 = vmul.f32 %v362, %v238
        %v377 = vmul.f32 %v362, %v239
        %v378 = vmul.f32 %v362, %v240
        %v379 = vadd.f32 %v344, %v363
        %v380 = vadd.f32 %v345, %v364
        %v381 = vadd.f32 %v346, %v365
        %v382 = vadd.f32 %v347, %v366
        %v383 = vadd.f32 %v348, %v367
        %v384 = vadd.f32 %v349, %v368
        %v385 = vadd.f32 %v350, %v369
        %v386 = vadd.f32 %v351, %v370
        %v387 = vadd.f32 %v352, %v371
        %v388 = vadd.f32 %v353, %v372
        %v389 = vadd.f32 %v354, %v373
        %v390 = vadd.f32 %v355, %v374
        %v391 = vadd.f32 %v356, %v375
        %v392 = vadd.f32 %v357, %v376
        %v393 = vadd.f32 %v358, %v377
        %v394 = vadd.f32 %v359, %v378
        %s395 = sadd.s32 %s341, 2
        %s396 = sld [smem:[#allocation2 + %s395]]
        %v397 = vstv %s396
        %v398 = vmul.f32 %v397, %v242
        %v399 = vmul.f32 %v397, %v243
        %v400 = vmul.f32 %v397, %v244
        %v401 = vmul.f32 %v397, %v245
        %v402 = vmul.f32 %v397, %v246
        %v403 = vmul.f32 %v397, %v247
        %v404 = vmul.f32 %v397, %v248
        %v405 = vmul.f32 %v397, %v249
        %v406 = vmul.f32 %v397, %v250
        %v407 = vmul.f32 %v397, %v251
        %v408 = vmul.f32 %v397, %v252
        %v409 = vmul.f32 %v397, %v253
        %v410 = vmul.f32 %v397, %v254
        %v411 = vmul.f32 %v397, %v255
        %v412 = vmul.f32 %v397, %v256
        %v413 = vmul.f32 %v397, %v257
        %v414 = vadd.f32 %v379, %v398
        %v415 = vadd.f32 %v380, %v399
        %v416 = vadd.f32 %v381, %v400
        %v417 = vadd.f32 %v382, %v401
        %v418 = vadd.f32 %v383, %v402
        %v419 = vadd.f32 %v384, %v403
        %v420 = vadd.f32 %v385, %v404
        %v421 = vadd.f32 %v386, %v405
        %v422 = vadd.f32 %v387, %v406
        %v423 = vadd.f32 %v388, %v407
        %v424 = vadd.f32 %v389, %v408
        %v425 = vadd.f32 %v390, %v409
        %v426 = vadd.f32 %v391, %v410
        %v427 = vadd.f32 %v392, %v411
        %v428 = vadd.f32 %v393, %v412
        %v429 = vadd.f32 %v394, %v413
        %s430 = sadd.s32 %s20, 2
        %s431 = smul.u32 %s430, 3
        %s432 = sld [smem:[#allocation2 + %s431]]
        %v433 = vstv %s432
        %v434 = vmul.f32 %v433, %v208
        %v435 = vmul.f32 %v433, %v209
        %v436 = vmul.f32 %v433, %v210
        %v437 = vmul.f32 %v433, %v211
        %v438 = vmul.f32 %v433, %v212
        %v439 = vmul.f32 %v433, %v213
        %v440 = vmul.f32 %v433, %v214
        %v441 = vmul.f32 %v433, %v215
        %v442 = vmul.f32 %v433, %v216
        %v443 = vmul.f32 %v433, %v217
        %v444 = vmul.f32 %v433, %v218
        %v445 = vmul.f32 %v433, %v219
        %v446 = vmul.f32 %v433, %v220
        %v447 = vmul.f32 %v433, %v221
        %v448 = vmul.f32 %v433, %v222
        %v449 = vmul.f32 %v433, %v223
        %s450 = sadd.s32 %s431, 1
        %s451 = sld [smem:[#allocation2 + %s450]]
        %v452 = vstv %s451
        %v453 = vmul.f32 %v452, %v225
        %v454 = vmul.f32 %v452, %v226
        %v455 = vmul.f32 %v452, %v227
        %v456 = vmul.f32 %v452, %v228
        %v457 = vmul.f32 %v452, %v229
        %v458 = vmul.f32 %v452, %v230
        %v459 = vmul.f32 %v452, %v231
        %v460 = vmul.f32 %v452, %v232
        %v461 = vmul.f32 %v452, %v233
        %v462 = vmul.f32 %v452, %v234
        %v463 = vmul.f32 %v452, %v235
        %v464 = vmul.f32 %v452, %v236
        %v465 = vmul.f32 %v452, %v237
        %v466 = vmul.f32 %v452, %v238
        %v467 = vmul.f32 %v452, %v239
        %v468 = vmul.f32 %v452, %v240
        %v469 = vadd.f32 %v434, %v453
        %v470 = vadd.f32 %v435, %v454
        %v471 = vadd.f32 %v436, %v455
        %v472 = vadd.f32 %v437, %v456
        %v473 = vadd.f32 %v438, %v457
        %v474 = vadd.f32 %v439, %v458
        %v475 = vadd.f32 %v440, %v459
        %v476 = vadd.f32 %v441, %v460
        %v477 = vadd.f32 %v442, %v461
        %v478 = vadd.f32 %v443, %v462
        %v479 = vadd.f32 %v444, %v463
        %v480 = vadd.f32 %v445, %v464
        %v481 = vadd.f32 %v446, %v465
        %v482 = vadd.f32 %v447, %v466
        %v483 = vadd.f32 %v448, %v467
        %v484 = vadd.f32 %v449, %v468
        %s485 = sadd.s32 %s431, 2
        %s486 = sld [smem:[#allocation2 + %s485]]
        %v487 = vstv %s486
        %v488 = vmul.f32 %v487, %v242
        %v489 = vmul.f32 %v487, %v243
        %v490 = vmul.f32 %v487, %v244
        %v491 = vmul.f32 %v487, %v245
        %v492 = vmul.f32 %v487, %v246
        %v493 = vmul.f32 %v487, %v247
        %v494 = vmul.f32 %v487, %v248
        %v495 = vmul.f32 %v487, %v249
        %v496 = vmul.f32 %v487, %v250
        %v497 = vmul.f32 %v487, %v251
        %v498 = vmul.f32 %v487, %v252
        %v499 = vmul.f32 %v487, %v253
        %v500 = vmul.f32 %v487, %v254
        %v501 = vmul.f32 %v487, %v255
        %v502 = vmul.f32 %v487, %v256
        %v503 = vmul.f32 %v487, %v257
        %v504 = vadd.f32 %v469, %v488
        %v505 = vadd.f32 %v470, %v489
        %v506 = vadd.f32 %v471, %v490
        %v507 = vadd.f32 %v472, %v491
        %v508 = vadd.f32 %v473, %v492
        %v509 = vadd.f32 %v474, %v493
        %v510 = vadd.f32 %v475, %v494
        %v511 = vadd.f32 %v476, %v495
        %v512 = vadd.f32 %v477, %v496
        %v513 = vadd.f32 %v478, %v497
        %v514 = vadd.f32 %v479, %v498
        %v515 = vadd.f32 %v480, %v499
        %v516 = vadd.f32 %v481, %v500
        %v517 = vadd.f32 %v482, %v501
        %v518 = vadd.f32 %v483, %v502
        %v519 = vadd.f32 %v484, %v503
        %v520 = vpack.c.bf16 %v415, %v414
        %v521 = vpack.c.bf16 %v417, %v416
        %v522 = vpack.c.bf16 %v419, %v418
        %v523 = vpack.c.bf16 %v421, %v420
        %v524 = vpack.c.bf16 %v423, %v422
        %v525 = vpack.c.bf16 %v425, %v424
        %v526 = vpack.c.bf16 %v427, %v426
        %v527 = vpack.c.bf16 %v429, %v428
        %v528 = vpack.c.bf16 %v505, %v504
        %v529 = vpack.c.bf16 %v507, %v506
        %v530 = vpack.c.bf16 %v509, %v508
        %v531 = vpack.c.bf16 %v511, %v510
        %v532 = vpack.c.bf16 %v513, %v512
        %v533 = vpack.c.bf16 %v515, %v514
        %v534 = vpack.c.bf16 %v517, %v516
        %v535 = vpack.c.bf16 %v519, %v518
        %536 = vmatpush.bf16.msra.mxu0 %v535
        %537 = vmatpush.bf16.msra.mxu0 %v534
        %538 = vmatpush.bf16.msra.mxu0 %v533
        %539 = vmatpush.bf16.msra.mxu0 %v532
        %540 = vmatpush.bf16.msra.mxu0 %v531
        %541 = vmatpush.bf16.msra.mxu0 %v530
        %542 = vmatpush.bf16.msra.mxu0 %v529
        %543 = vmatpush.bf16.msra.mxu0 %v528
        %544 = vmatmul.bf16.gmra.mxu0 %v520
        %v545 = vpop.f32.mrf.mxu0
        %v546 = vadd.f32 0.0, %v545
        %v547 = vpop.f32.mrf.mxu0
        %v548 = vadd.f32 0.0, %v547
        %549 = vmatmul.bf16.gmra.mxu0 %v521
        %v550 = vpop.f32.mrf.mxu0
        %v551 = vadd.f32 0.0, %v550
        %v552 = vpop.f32.mrf.mxu0
        %v553 = vadd.f32 0.0, %v552
        %554 = vmatmul.bf16.gmra.mxu0 %v522
        %v555 = vpop.f32.mrf.mxu0
        %v556 = vadd.f32 0.0, %v555
        %v557 = vpop.f32.mrf.mxu0
        %v558 = vadd.f32 0.0, %v557
        %559 = vmatmul.bf16.gmra.mxu0 %v523
        %v560 = vpop.f32.mrf.mxu0
        %v561 = vadd.f32 0.0, %v560
        %v562 = vpop.f32.mrf.mxu0
        %v563 = vadd.f32 0.0, %v562
        %564 = vmatmul.bf16.gmra.mxu0 %v524
        %v565 = vpop.f32.mrf.mxu0
        %v566 = vadd.f32 0.0, %v565
        %v567 = vpop.f32.mrf.mxu0
        %v568 = vadd.f32 0.0, %v567
        %569 = vmatmul.bf16.gmra.mxu0 %v525
        %v570 = vpop.f32.mrf.mxu0
        %v571 = vadd.f32 0.0, %v570
        %v572 = vpop.f32.mrf.mxu0
        %v573 = vadd.f32 0.0, %v572
        %574 = vmatmul.bf16.gmra.mxu0 %v526
        %v575 = vpop.f32.mrf.mxu0
        %v576 = vadd.f32 0.0, %v575
        %v577 = vpop.f32.mrf.mxu0
        %v578 = vadd.f32 0.0, %v577
        %579 = vmatmul.bf16.gmra.mxu0 %v527
        %v580 = vpop.f32.mrf.mxu0
        %v581 = vadd.f32 0.0, %v580
        %v582 = vpop.f32.mrf.mxu0
        %v583 = vadd.f32 0.0, %v582
        %584 = vdwg.mxu0
        %s585 = sadd.s32 %s20, 4
        %s586 = smul.u32 %s585, 3
        %s587 = sld [smem:[#allocation2 + %s586]]
        %v588 = vstv %s587
        %v589 = vmul.f32 %v588, %v208
        %v590 = vmul.f32 %v588, %v209
        %v591 = vmul.f32 %v588, %v210
        %v592 = vmul.f32 %v588, %v211
        %v593 = vmul.f32 %v588, %v212
        %v594 = vmul.f32 %v588, %v213
        %v595 = vmul.f32 %v588, %v214
        %v596 = vmul.f32 %v588, %v215
        %v597 = vmul.f32 %v588, %v216
        %v598 = vmul.f32 %v588, %v217
        %v599 = vmul.f32 %v588, %v218
        %v600 = vmul.f32 %v588, %v219
        %v601 = vmul.f32 %v588, %v220
        %v602 = vmul.f32 %v588, %v221
        %v603 = vmul.f32 %v588, %v222
        %v604 = vmul.f32 %v588, %v223
        %s605 = sadd.s32 %s586, 1
        %s606 = sld [smem:[#allocation2 + %s605]]
        %v607 = vstv %s606
        %v608 = vmul.f32 %v607, %v225
        %v609 = vmul.f32 %v607, %v226
        %v610 = vmul.f32 %v607, %v227
        %v611 = vmul.f32 %v607, %v228
        %v612 = vmul.f32 %v607, %v229
        %v613 = vmul.f32 %v607, %v230
        %v614 = vmul.f32 %v607, %v231
        %v615 = vmul.f32 %v607, %v232
        %v616 = vmul.f32 %v607, %v233
        %v617 = vmul.f32 %v607, %v234
        %v618 = vmul.f32 %v607, %v235
        %v619 = vmul.f32 %v607, %v236
        %v620 = vmul.f32 %v607, %v237
        %v621 = vmul.f32 %v607, %v238
        %v622 = vmul.f32 %v607, %v239
        %v623 = vmul.f32 %v607, %v240
        %v624 = vadd.f32 %v589, %v608
        %v625 = vadd.f32 %v590, %v609
        %v626 = vadd.f32 %v591, %v610
        %v627 = vadd.f32 %v592, %v611
        %v628 = vadd.f32 %v593, %v612
        %v629 = vadd.f32 %v594, %v613
        %v630 = vadd.f32 %v595, %v614
        %v631 = vadd.f32 %v596, %v615
        %v632 = vadd.f32 %v597, %v616
        %v633 = vadd.f32 %v598, %v617
        %v634 = vadd.f32 %v599, %v618
        %v635 = vadd.f32 %v600, %v619
        %v636 = vadd.f32 %v601, %v620
        %v637 = vadd.f32 %v602, %v621
        %v638 = vadd.f32 %v603, %v622
        %v639 = vadd.f32 %v604, %v623
        %s640 = sadd.s32 %s586, 2
        %s641 = sld [smem:[#allocation2 + %s640]]
        %v642 = vstv %s641
        %v643 = vmul.f32 %v642, %v242
        %v644 = vmul.f32 %v642, %v243
        %v645 = vmul.f32 %v642, %v244
        %v646 = vmul.f32 %v642, %v245
        %v647 = vmul.f32 %v642, %v246
        %v648 = vmul.f32 %v642, %v247
        %v649 = vmul.f32 %v642, %v248
        %v650 = vmul.f32 %v642, %v249
        %v651 = vmul.f32 %v642, %v250
        %v652 = vmul.f32 %v642, %v251
        %v653 = vmul.f32 %v642, %v252
        %v654 = vmul.f32 %v642, %v253
        %v655 = vmul.f32 %v642, %v254
        %v656 = vmul.f32 %v642, %v255
        %v657 = vmul.f32 %v642, %v256
        %v658 = vmul.f32 %v642, %v257
        %v659 = vadd.f32 %v624, %v643
        %v660 = vadd.f32 %v625, %v644
        %v661 = vadd.f32 %v626, %v645
        %v662 = vadd.f32 %v627, %v646
        %v663 = vadd.f32 %v628, %v647
        %v664 = vadd.f32 %v629, %v648
        %v665 = vadd.f32 %v630, %v649
        %v666 = vadd.f32 %v631, %v650
        %v667 = vadd.f32 %v632, %v651
        %v668 = vadd.f32 %v633, %v652
        %v669 = vadd.f32 %v634, %v653
        %v670 = vadd.f32 %v635, %v654
        %v671 = vadd.f32 %v636, %v655
        %v672 = vadd.f32 %v637, %v656
        %v673 = vadd.f32 %v638, %v657
        %v674 = vadd.f32 %v639, %v658
        %v675 = vmul.f32 %v546, %v325
        %v676 = vmul.f32 %v548, %v326
        %v677 = vmul.f32 %v551, %v327
        %v678 = vmul.f32 %v553, %v328
        %v679 = vmul.f32 %v556, %v329
        %v680 = vmul.f32 %v558, %v330
        %v681 = vmul.f32 %v561, %v331
        %v682 = vmul.f32 %v563, %v332
        %v683 = vmul.f32 %v566, %v333
        %v684 = vmul.f32 %v568, %v334
        %v685 = vmul.f32 %v571, %v335
        %v686 = vmul.f32 %v573, %v336
        %v687 = vmul.f32 %v576, %v337
        %v688 = vmul.f32 %v578, %v338
        %v689 = vmul.f32 %v581, %v339
        %v690 = vmul.f32 %v583, %v340
        %v691 = vadd.f32 %v675, %v676
        %v692 = vadd.f32 %v691, %v677
        %v693 = vadd.f32 %v692, %v678
        %v694 = vadd.f32 %v693, %v679
        %v695 = vadd.f32 %v694, %v680
        %v696 = vadd.f32 %v695, %v681
        %v697 = vadd.f32 %v696, %v682
        %v698 = vadd.f32 %v697, %v683
        %v699 = vadd.f32 %v698, %v684
        %v700 = vadd.f32 %v699, %v685
        %v701 = vadd.f32 %v700, %v686
        %v702 = vadd.f32 %v701, %v687
        %v703 = vadd.f32 %v702, %v688
        %v704 = vadd.f32 %v703, %v689
        %v705 = vadd.f32 %v704, %v690
        %v706 = vrot.slane %v705, 4
        %v707 = vadd.f32 %v705, %v706
        %v708 = vrot.slane %v707, 2
        %v709 = vadd.f32 %v707, %v708
        %v710 = vrot.slane %v709, 1
        %v711 = vadd.f32 %v709, %v710
        %vm712 = vcmp.eq.f32.partialorder %v711, 0.0
        %v713 = vadd.f32 %v711, 1e-08
        %v714 = vrcp.pop %v713
        %v715 = vsel %vm712, 0.0, %v714
        %v716 = vmul.f32 %v675, %v715
        %v717 = vmul.f32 %v676, %v715
        %v718 = vmul.f32 %v677, %v715
        %v719 = vmul.f32 %v678, %v715
        %v720 = vmul.f32 %v679, %v715
        %v721 = vmul.f32 %v680, %v715
        %v722 = vmul.f32 %v681, %v715
        %v723 = vmul.f32 %v682, %v715
        %v724 = vmul.f32 %v683, %v715
        %v725 = vmul.f32 %v684, %v715
        %v726 = vmul.f32 %v685, %v715
        %v727 = vmul.f32 %v686, %v715
        %v728 = vmul.f32 %v687, %v715
        %v729 = vmul.f32 %v688, %v715
        %v730 = vmul.f32 %v689, %v715
        %v731 = vmul.f32 %v690, %v715
        %v732 = vpack.c.bf16 %v717, %v716
        %v733 = vpack.c.bf16 %v719, %v718
        %v734 = vpack.c.bf16 %v721, %v720
        %v735 = vpack.c.bf16 %v723, %v722
        %v736 = vpack.c.bf16 %v725, %v724
        %v737 = vpack.c.bf16 %v727, %v726
        %v738 = vpack.c.bf16 %v729, %v728
        %v739 = vpack.c.bf16 %v731, %v730
        %v740 = vpack.c.bf16 %v660, %v659
        %v741 = vpack.c.bf16 %v662, %v661
        %v742 = vpack.c.bf16 %v664, %v663
        %v743 = vpack.c.bf16 %v666, %v665
        %v744 = vpack.c.bf16 %v668, %v667
        %v745 = vpack.c.bf16 %v670, %v669
        %v746 = vpack.c.bf16 %v672, %v671
        %v747 = vpack.c.bf16 %v674, %v673
        %748 = vmatpush.bf16.msra.mxu0 %v747
        %749 = vmatpush.bf16.msra.mxu0 %v746
        %750 = vmatpush.bf16.msra.mxu0 %v745
        %751 = vmatpush.bf16.msra.mxu0 %v744
        %752 = vmatpush.bf16.msra.mxu0 %v743
        %753 = vmatpush.bf16.msra.mxu0 %v742
        %754 = vmatpush.bf16.msra.mxu0 %v741
        %755 = vmatpush.bf16.msra.mxu0 %v740
        %756 = vmatmul.bf16.gmra.mxu0 %v732
        %v757 = vpop.f32.mrf.mxu0
        %v758 = vadd.f32 0.0, %v757
        %v759 = vpop.f32.mrf.mxu0
        %v760 = vadd.f32 0.0, %v759
        %761 = vmatmul.bf16.gmra.mxu0 %v733
        %v762 = vpop.f32.mrf.mxu0
        %v763 = vadd.f32 0.0, %v762
        %v764 = vpop.f32.mrf.mxu0
        %v765 = vadd.f32 0.0, %v764
        %766 = vmatmul.bf16.gmra.mxu0 %v734
        %v767 = vpop.f32.mrf.mxu0
        %v768 = vadd.f32 0.0, %v767
        %v769 = vpop.f32.mrf.mxu0
        %v770 = vadd.f32 0.0, %v769
        %771 = vmatmul.bf16.gmra.mxu0 %v735
        %v772 = vpop.f32.mrf.mxu0
        %v773 = vadd.f32 0.0, %v772
        %v774 = vpop.f32.mrf.mxu0
        %v775 = vadd.f32 0.0, %v774
        %776 = vmatmul.bf16.gmra.mxu0 %v736
        %v777 = vpop.f32.mrf.mxu0
        %v778 = vadd.f32 0.0, %v777
        %v779 = vpop.f32.mrf.mxu0
        %v780 = vadd.f32 0.0, %v779
        %781 = vmatmul.bf16.gmra.mxu0 %v737
        %v782 = vpop.f32.mrf.mxu0
        %v783 = vadd.f32 0.0, %v782
        %v784 = vpop.f32.mrf.mxu0
        %v785 = vadd.f32 0.0, %v784
        %786 = vmatmul.bf16.gmra.mxu0 %v738
        %v787 = vpop.f32.mrf.mxu0
        %v788 = vadd.f32 0.0, %v787
        %v789 = vpop.f32.mrf.mxu0
        %v790 = vadd.f32 0.0, %v789
        %791 = vmatmul.bf16.gmra.mxu0 %v739
        %v792 = vpop.f32.mrf.mxu0
        %v793 = vadd.f32 0.0, %v792
        %v794 = vpop.f32.mrf.mxu0
        %v795 = vadd.f32 0.0, %v794
        %796 = vdwg.mxu0
        %v797 = vld [vmem:[%s2] sm:$0xff]
        %v798 = vld [vmem:[%s2 + $0x8] sm:$0xff]
        %v799 = vld [vmem:[%s2 + $0x10] sm:$0xff]
        %v800 = vld [vmem:[%s2 + $0x18] sm:$0xff]
        %v801 = vld [vmem:[%s2 + $0x20] sm:$0xff]
        %v802 = vld [vmem:[%s2 + $0x28] sm:$0xff]
        %v803 = vld [vmem:[%s2 + $0x30] sm:$0xff]
        %v804 = vld [vmem:[%s2 + $0x38] sm:$0xff]
        %v805 = vld [vmem:[%s2 + $0x40] sm:$0xff]
        %v806 = vld [vmem:[%s2 + $0x48] sm:$0xff]
        %v807 = vld [vmem:[%s2 + $0x50] sm:$0xff]
        %v808 = vld [vmem:[%s2 + $0x58] sm:$0xff]
        %v809 = vld [vmem:[%s2 + $0x60] sm:$0xff]
        %v810 = vld [vmem:[%s2 + $0x68] sm:$0xff]
        %v811 = vld [vmem:[%s2 + $0x70] sm:$0xff]
        %v812 = vld [vmem:[%s2 + $0x78] sm:$0xff]
        %v813 = vpack.c.bf16 %v798, %v797
        %v814 = vpack.c.bf16 %v800, %v799
        %v815 = vpack.c.bf16 %v802, %v801
        %v816 = vpack.c.bf16 %v804, %v803
        %v817 = vpack.c.bf16 %v806, %v805
        %v818 = vpack.c.bf16 %v808, %v807
        %v819 = vpack.c.bf16 %v810, %v809
        %v820 = vpack.c.bf16 %v812, %v811
        %v821 = vld [vmem:[%s3] sm:$0xff]
        %v822 = vld [vmem:[%s3 + $0x8] sm:$0xff]
        %v823 = vld [vmem:[%s3 + $0x10] sm:$0xff]
        %v824 = vld [vmem:[%s3 + $0x18] sm:$0xff]
        %v825 = vpack.c.bf16 %v822, %v821
        %v826 = vpack.c.bf16 %v824, %v823
        %vm827 = vcmask 261120
        %v829 = vsel %vm827, %v813, 0
        %v832 = vsel %vm827, %v814, 0
        %v835 = vsel %vm827, %v815, 0
        %v838 = vsel %vm827, %v816, 0
        %v841 = vsel %vm827, %v817, 0
        %v844 = vsel %vm827, %v818, 0
        %v847 = vsel %vm827, %v819, 0
        %v850 = vsel %vm827, %v820, 0
        %852 = vmatpush.bf16.msra.mxu0 0
        %853 = vmatpush.bf16.msra.mxu0 0
        %854 = vmatpush.bf16.msra.mxu0 0
        %855 = vmatpush.bf16.msra.mxu0 0
        %856 = vmatpush.bf16.msra.mxu0 0
        %857 = vmatpush.bf16.msra.mxu0 0
        %858 = vmatpush.bf16.msra.mxu0 %v826
        %859 = vmatpush.bf16.msra.mxu0 %v825
        %860 = vmatmul.bf16.gmra.mxu0 %v829
        %v861 = vpop.f32.mrf.mxu0
        %v862 = vadd.f32 0.0, %v861
        %v863 = vpop.f32.mrf.mxu0
        %v864 = vadd.f32 0.0, %v863
        %865 = vmatmul.bf16.gmra.mxu0 %v832
        %v866 = vpop.f32.mrf.mxu0
        %v867 = vadd.f32 0.0, %v866
        %v868 = vpop.f32.mrf.mxu0
        %v869 = vadd.f32 0.0, %v868
        %870 = vmatmul.bf16.gmra.mxu0 %v835
        %v871 = vpop.f32.mrf.mxu0
        %v872 = vadd.f32 0.0, %v871
        %v873 = vpop.f32.mrf.mxu0
        %v874 = vadd.f32 0.0, %v873
        %875 = vmatmul.bf16.gmra.mxu0 %v838
        %v876 = vpop.f32.mrf.mxu0
        %v877 = vadd.f32 0.0, %v876
        %v878 = vpop.f32.mrf.mxu0
        %v879 = vadd.f32 0.0, %v878
        %880 = vmatmul.bf16.gmra.mxu0 %v841
        %v881 = vpop.f32.mrf.mxu0
        %v882 = vadd.f32 0.0, %v881
        %v883 = vpop.f32.mrf.mxu0
        %v884 = vadd.f32 0.0, %v883
        %885 = vmatmul.bf16.gmra.mxu0 %v844
        %v886 = vpop.f32.mrf.mxu0
        %v887 = vadd.f32 0.0, %v886
        %v888 = vpop.f32.mrf.mxu0
        %v889 = vadd.f32 0.0, %v888
        %890 = vmatmul.bf16.gmra.mxu0 %v847
        %v891 = vpop.f32.mrf.mxu0
        %v892 = vadd.f32 0.0, %v891
        %v893 = vpop.f32.mrf.mxu0
        %v894 = vadd.f32 0.0, %v893
        %895 = vmatmul.bf16.gmra.mxu0 %v850
        %v896 = vpop.f32.mrf.mxu0
        %v897 = vadd.f32 0.0, %v896
        %v898 = vpop.f32.mrf.mxu0
        %v899 = vadd.f32 0.0, %v898
        %900 = vdwg.mxu0
        %v901 = vmul.f32 %v758, %v325
        %v902 = vmul.f32 %v760, %v326
        %v903 = vmul.f32 %v763, %v327
        %v904 = vmul.f32 %v765, %v328
        %v905 = vmul.f32 %v768, %v329
        %v906 = vmul.f32 %v770, %v330
        %v907 = vmul.f32 %v773, %v331
        %v908 = vmul.f32 %v775, %v332
        %v909 = vmul.f32 %v778, %v333
        %v910 = vmul.f32 %v780, %v334
        %v911 = vmul.f32 %v783, %v335
        %v912 = vmul.f32 %v785, %v336
        %v913 = vmul.f32 %v788, %v337
        %v914 = vmul.f32 %v790, %v338
        %v915 = vmul.f32 %v793, %v339
        %v916 = vmul.f32 %v795, %v340
        %v917 = vadd.f32 %v901, %v309
        %v918 = vadd.f32 %v902, %v310
        %v919 = vadd.f32 %v903, %v311
        %v920 = vadd.f32 %v904, %v312
        %v921 = vadd.f32 %v905, %v313
        %v922 = vadd.f32 %v906, %v314
        %v923 = vadd.f32 %v907, %v315
        %v924 = vadd.f32 %v908, %v316
        %v925 = vadd.f32 %v909, %v317
        %v926 = vadd.f32 %v910, %v318
        %v927 = vadd.f32 %v911, %v319
        %v928 = vadd.f32 %v912, %v320
        %v929 = vadd.f32 %v913, %v321
        %v930 = vadd.f32 %v914, %v322
        %v931 = vadd.f32 %v915, %v323
        %v932 = vadd.f32 %v916, %v324
        %v933 = vadd.f32 %v917, %v918
        %v934 = vadd.f32 %v933, %v919
        %v935 = vadd.f32 %v934, %v920
        %v936 = vadd.f32 %v935, %v921
        %v937 = vadd.f32 %v936, %v922
        %v938 = vadd.f32 %v937, %v923
        %v939 = vadd.f32 %v938, %v924
        %v940 = vadd.f32 %v939, %v925
        %v941 = vadd.f32 %v940, %v926
        %v942 = vadd.f32 %v941, %v927
        %v943 = vadd.f32 %v942, %v928
        %v944 = vadd.f32 %v943, %v929
        %v945 = vadd.f32 %v944, %v930
        %v946 = vadd.f32 %v945, %v931
        %v947 = vadd.f32 %v946, %v932
        %v948 = vrot.slane %v947, 4
        %v949 = vadd.f32 %v947, %v948
        %v950 = vrot.slane %v949, 2
        %v951 = vadd.f32 %v949, %v950
        %v952 = vrot.slane %v951, 1
        %v953 = vadd.f32 %v951, %v952
        %vm954 = vcmp.eq.f32.partialorder %v953, 0.0
        %v955 = vadd.f32 %v953, 1e-08
        %v956 = vrcp.pop %v955
        %v957 = vsel %vm954, 0.0, %v956
        %v958 = vmul.f32 %v917, %v957
        %v959 = vmul.f32 %v918, %v957
        %v960 = vmul.f32 %v919, %v957
        %v961 = vmul.f32 %v920, %v957
        %v962 = vmul.f32 %v921, %v957
        %v963 = vmul.f32 %v922, %v957
        %v964 = vmul.f32 %v923, %v957
        %v965 = vmul.f32 %v924, %v957
        %v966 = vmul.f32 %v925, %v957
        %v967 = vmul.f32 %v926, %v957
        %v968 = vmul.f32 %v927, %v957
        %v969 = vmul.f32 %v928, %v957
        %v970 = vmul.f32 %v929, %v957
        %v971 = vmul.f32 %v930, %v957
        %v972 = vmul.f32 %v931, %v957
        %v973 = vmul.f32 %v932, %v957
        %v974 = vpack.c.bf16 %v959, %v958
        %v975 = vpack.c.bf16 %v961, %v960
        %v976 = vpack.c.bf16 %v963, %v962
        %v977 = vpack.c.bf16 %v965, %v964
        %v978 = vpack.c.bf16 %v967, %v966
        %v979 = vpack.c.bf16 %v969, %v968
        %v980 = vpack.c.bf16 %v971, %v970
        %v981 = vpack.c.bf16 %v973, %v972
        %v982 = vpack.c.bf16 %v864, %v862
        %v983 = vpack.c.bf16 %v869, %v867
        %v984 = vpack.c.bf16 %v874, %v872
        %v985 = vpack.c.bf16 %v879, %v877
        %v986 = vpack.c.bf16 %v884, %v882
        %v987 = vpack.c.bf16 %v889, %v887
        %v988 = vpack.c.bf16 %v894, %v892
        %v989 = vpack.c.bf16 %v899, %v897
        %990 = vxpose.xlu0.c.b16.start [1/8] %v974, 128
        %991 = vxpose.xlu0.c.b16.cont [2/8] %v975, 128
        %992 = vxpose.xlu0.c.b16.cont [3/8] %v976, 128
        %993 = vxpose.xlu0.c.b16.cont [4/8] %v977, 128
        %994 = vxpose.xlu0.c.b16.cont [5/8] %v978, 128
        %995 = vxpose.xlu0.c.b16.cont [6/8] %v979, 128
        %996 = vxpose.xlu0.c.b16.cont [7/8] %v980, 128
        %997 = vxpose.xlu0.c.b16.end [8/8] %v981, 128
        %v998 = vpop.trf.xlu0
        %v999 = vpop.trf.xlu0
        %v1000 = vpop.trf.xlu0
        %v1001 = vpop.trf.xlu0
        %v1002 = vpop.trf.xlu0
        %v1003 = vpop.trf.xlu0
        %v1004 = vpop.trf.xlu0
        %v1005 = vpop.trf.xlu0
        %1006 = vmatpush.bf16.msra.mxu0 %v989
        %1007 = vmatpush.bf16.msra.mxu0 %v988
        %1008 = vmatpush.bf16.msra.mxu0 %v987
        %1009 = vmatpush.bf16.msra.mxu0 %v986
        %1010 = vmatpush.bf16.msra.mxu0 %v985
        %1011 = vmatpush.bf16.msra.mxu0 %v984
        %1012 = vmatpush.bf16.msra.mxu0 %v983
        %1013 = vmatpush.bf16.msra.mxu0 %v982
        %1014 = vmatmul.bf16.gmra.mxu0 %v998
        %v1015 = vpop.f32.mrf.mxu0
        %v1016 = vadd.f32 0.0, %v1015
        %v1017 = vpop.f32.mrf.mxu0
        %v1018 = vadd.f32 0.0, %v1017
        %1019 = vmatmul.bf16.gmra.mxu0 %v999
        %v1020 = vpop.f32.mrf.mxu0
        %v1021 = vadd.f32 0.0, %v1020
        %v1022 = vpop.f32.mrf.mxu0
        %v1023 = vadd.f32 0.0, %v1022
        %1024 = vmatmul.bf16.gmra.mxu0 %v1000
        %v1025 = vpop.f32.mrf.mxu0
        %v1026 = vadd.f32 0.0, %v1025
        %v1027 = vpop.f32.mrf.mxu0
        %v1028 = vadd.f32 0.0, %v1027
        %1029 = vmatmul.bf16.gmra.mxu0 %v1001
        %v1030 = vpop.f32.mrf.mxu0
        %v1031 = vadd.f32 0.0, %v1030
        %v1032 = vpop.f32.mrf.mxu0
        %v1033 = vadd.f32 0.0, %v1032
        %1034 = vmatmul.bf16.gmra.mxu0 %v1002
        %v1035 = vpop.f32.mrf.mxu0
        %v1036 = vadd.f32 0.0, %v1035
        %v1037 = vpop.f32.mrf.mxu0
        %v1038 = vadd.f32 0.0, %v1037
        %1039 = vmatmul.bf16.gmra.mxu0 %v1003
        %v1040 = vpop.f32.mrf.mxu0
        %v1041 = vadd.f32 0.0, %v1040
        %v1042 = vpop.f32.mrf.mxu0
        %v1043 = vadd.f32 0.0, %v1042
        %1044 = vmatmul.bf16.gmra.mxu0 %v1004
        %v1045 = vpop.f32.mrf.mxu0
        %v1046 = vadd.f32 0.0, %v1045
        %v1047 = vpop.f32.mrf.mxu0
        %v1048 = vadd.f32 0.0, %v1047
        %1049 = vmatmul.bf16.gmra.mxu0 %v1005
        %v1050 = vpop.f32.mrf.mxu0
        %v1051 = vadd.f32 0.0, %v1050
        %v1052 = vpop.f32.mrf.mxu0
        %v1053 = vadd.f32 0.0, %v1052
        %1054 = vdwg.mxu0
        %v1055 = vmax.f32 %v1016, 0.0
        %v1056 = vmax.f32 %v1018, 0.0
        %v1057 = vmax.f32 %v1021, 0.0
        %v1058 = vmax.f32 %v1023, 0.0
        %v1059 = vmax.f32 %v1026, 0.0
        %v1060 = vmax.f32 %v1028, 0.0
        %v1061 = vmax.f32 %v1031, 0.0
        %v1062 = vmax.f32 %v1033, 0.0
        %v1063 = vmax.f32 %v1036, 0.0
        %v1064 = vmax.f32 %v1038, 0.0
        %v1065 = vmax.f32 %v1041, 0.0
        %v1066 = vmax.f32 %v1043, 0.0
        %v1067 = vmax.f32 %v1046, 0.0
        %v1068 = vmax.f32 %v1048, 0.0
        %v1069 = vmax.f32 %v1051, 0.0
        %v1070 = vmax.f32 %v1053, 0.0
        %1071 = vst [vmem:[%s206] sm:$0xff] %v1055
        %1072 = vst [vmem:[%s206 + $0x8] sm:$0xff] %v1056
        %1073 = vst [vmem:[%s206 + $0x10] sm:$0xff] %v1057
        %1074 = vst [vmem:[%s206 + $0x18] sm:$0xff] %v1058
        %1075 = vst [vmem:[%s206 + $0x20] sm:$0xff] %v1059
        %1076 = vst [vmem:[%s206 + $0x28] sm:$0xff] %v1060
        %1077 = vst [vmem:[%s206 + $0x30] sm:$0xff] %v1061
        %1078 = vst [vmem:[%s206 + $0x38] sm:$0xff] %v1062
        %1079 = vst [vmem:[%s206 + $0x40] sm:$0xff] %v1063
        %1080 = vst [vmem:[%s206 + $0x48] sm:$0xff] %v1064
        %1081 = vst [vmem:[%s206 + $0x50] sm:$0xff] %v1065
        %1082 = vst [vmem:[%s206 + $0x58] sm:$0xff] %v1066
        %1083 = vst [vmem:[%s206 + $0x60] sm:$0xff] %v1067
        %1084 = vst [vmem:[%s206 + $0x68] sm:$0xff] %v1068
        %1085 = vst [vmem:[%s206 + $0x70] sm:$0xff] %v1069
        %1086 = vst [vmem:[%s206 + $0x78] sm:$0xff] %v1070
        %s1087 = sand.u32 %s112, 1
        %s1088 = scalar_lea.sflag [#allocation4], %s1087
        %s1089 = sand.u32 %s112, 1
        %s1090 = smul.addr %s1089, 128
        %s1091 = scalar_lea.vmem [#allocation7], %s1090
        // Predicated region
        $region45: #{tpu_custom_call.1} parent=35 // pred_check
          %p1092 = pneg %p122
        $region46: #{tpu_custom_call.1} parent=35 // pred_check_branch
          %1094 = sbr.rel (%p1092) target = $region48
        $region47: #{tpu_custom_call.1} parent=35 // pred_region
          %1096 = vsyncadd %s1088, 0
          %s1097 = smul.addr %s20, 8
          %s1098 = scalar_lea.hbm %s4, %s1097
          %s1099 = sshll.u32 %s1091, 4
          %s1100 = int_to_ptr.vmem [resolvable:$true] %s1099
          %s1101 = sshll.u32 %s1098, 4
          %s1102 = int_to_ptr.hbm [resolvable:$true] %s1101
          %1107 = dma.vmem_to_hbm [thread:$0]  %s1100, 2048, %s1102, %s1088, 128, 256, 8
        $region48: #{tpu_custom_call.1} parent=35 // pred_fallthru
          _
      $region36: #{tpu_custom_call.1} parent=5 // pred_fallthru
        _
      %p1108 = scmp.le.s32.totalorder 2, %s15
      // Predicated region
      $region49: #{tpu_custom_call.1} parent=5 // pred_check
        %p1109 = pneg %p1108
      $region50: #{tpu_custom_call.1} parent=5 // pred_check_branch
        %1111 = sbr.rel (%p1109) target = $region52
      $region51: #{tpu_custom_call.1} parent=5 // pred_region
        %s1112 = ssub.s32 %s15, 2
        // Predicated region
        $region53: #{tpu_custom_call.1} parent=51 // pred_check
          %p1113 = pneg %p128
        $region54: #{tpu_custom_call.1} parent=51 // pred_check_branch
          %1115 = sbr.rel (%p1113) target = $region56
        $region55: #{tpu_custom_call.1} parent=51 // pred_region
          %s1116 = sand.u32 %s113, 1
          %s1117 = scalar_lea.sflag [#allocation4], %s1116
          %s1118 = sand.u32 %s113, 1
          %s1119 = smul.addr %s1118, 128
          %s1120 = scalar_lea.vmem [#allocation7], %s1119
          %1122 = dma.done %s1117, 2048
        $region56: #{tpu_custom_call.1} parent=51 // pred_fallthru
          _
      $region52: #{tpu_custom_call.1} parent=5 // pred_fallthru
        _
    $region6: #{tpu_custom_call.1} parent=1 // loop_footer
      %s19 = sadd.s32 1, %s15
    $region7: #{tpu_custom_call.1} parent=1 // loop_footer_branch
      %14 = sbr.rel target = $region3
    $region8: #{tpu_custom_call.1} parent=1 // loop_exit
      _
    %1123 = vsyncpa [#allocation3], 1
    %s1124 = scalar_lea.sflag [#allocation3], 1
    %1125 = vsyncpa %s1124, 1
    %1126 = vsyncpa [#allocation4], 1
    %s1127 = scalar_lea.sflag [#allocation4], 1
    %1128 = vsyncpa %s1127, 1
    %1129 = vsyncpa [#allocation5], 1
    %s1130 = scalar_lea.sflag [#allocation5], 1
    %1131 = vsyncpa %s1130, 1

</llo_original>
